<compile_context>
chip_gen: v5e
topology: v5e:2x2
jax: 0.10.0
libtpu: 0.0.40
codegen_flags: <defaults>
</compile_context>

<pallas_src>
import jax
import jax.numpy as jnp
from jax.experimental import pallas as pl
from jax.experimental.pallas import tpu as pltpu

IN_FEATURES = 8
HIDDEN = 1620
OUT_FEATURES = 40
HIDDEN_PAD = 1664          # 13 * 128 : lane-dense hidden dimension
SLAB = 256                 # layer-1/layer-2 interleave granularity (MXU depth)


def _round_up(x, m):
    return (x + m - 1) // m * m


def _pick_layer1_on_vpu():
    """v6e/v7x: K=8 layer 1 is cheaper on the VPU and overlaps with layer-2 MXU
    accumulation. v5e/older (no bf16 VPU, no f32 FMA): keep both layers on MXU."""
    try:
        kind = jax.devices()[0].device_kind.lower()
    except Exception:
        return False
    return ("v6" in kind) or ("v7" in kind) or ("7x" in kind)


_USE_VPU_LAYER1 = _pick_layer1_on_vpu()


# --------------------------------------------------------------------------
# One-time parameter prep (call once at init, NOT per forward call).
# --------------------------------------------------------------------------
def prepare_params(w1, b1, w2, b2):
    """w1:(8,1620) b1:(1620,) w2:(1620,40) b2:(40,) f32  ->  padded/bf16 set."""
    w1p = jnp.zeros((IN_FEATURES, HIDDEN_PAD), jnp.bfloat16)
    w1p = w1p.at[:, :HIDDEN].set(w1.astype(jnp.bfloat16))
    b1p = jnp.zeros((1, HIDDEN_PAD), jnp.float32)
    b1p = b1p.at[:, :HIDDEN].set(b1.reshape(1, HIDDEN).astype(jnp.float32))
    w2p = jnp.zeros((HIDDEN_PAD, OUT_FEATURES), jnp.bfloat16)
    w2p = w2p.at[:HIDDEN, :].set(w2.astype(jnp.bfloat16))
    b2p = b2.reshape(1, OUT_FEATURES).astype(jnp.float32)
    return w1p, b1p, w2p, b2p


# --------------------------------------------------------------------------
# Kernel bodies
# --------------------------------------------------------------------------
def mlp_kernel_mxu(x_ref, w1_ref, b1_ref, w2_ref, b2_ref, o_ref):
    """Both layers on the MXU (bf16 inputs, f32 accumulation). Used on v5e."""
    x = x_ref[...].astype(jnp.bfloat16)                       # (TB, 8)
    h = jnp.dot(x, w1_ref[...],
                preferred_element_type=jnp.float32)           # (TB, 1664) f32
    h = jnp.maximum(h + b1_ref[...], 0.0)                     # bias + ReLU
    y = jnp.dot(h.astype(jnp.bfloat16), w2_ref[...],
                preferred_element_type=jnp.float32)           # (TB, 40)   f32
    o_ref[...] = y + b2_ref[...]


def mlp_kernel_vpu(x_ref, w1_ref, b1_ref, w2_ref, b2_ref, o_ref):
    """Layer 1 as VPU broadcast MACs per 256-wide hidden slab, layer 2 as MXU
    accumulation per slab -> VPU and MXU work overlap. Used on v6e/v7x."""
    x = x_ref[...]                                            # (TB, 8) f32
    tb = x.shape[0]
    xk = [x[:, k:k + 1] for k in range(IN_FEATURES)]          # (TB,1) columns
    y = jnp.zeros((tb, OUT_FEATURES), jnp.float32)
    for lo in range(0, HIDDEN_PAD, SLAB):
        sz = min(SLAB, HIDDEN_PAD - lo)
        w1s = w1_ref[:, lo:lo + sz].astype(jnp.float32)       # (8, sz)
        h = xk[0] * w1s[0:1, :]                               # (TB, sz)
        for k in range(1, IN_FEATURES):
            h = h + xk[k] * w1s[k:k + 1, :]
        h = jnp.maximum(h + b1_ref[:, lo:lo + sz], 0.0)       # bias + ReLU
        y = y + jnp.dot(h.astype(jnp.bfloat16), w2_ref[lo:lo + sz, :],
                        preferred_element_type=jnp.float32)   # MXU accumulate
    o_ref[...] = y + b2_ref[...]


# --------------------------------------------------------------------------
# Forward wrapper
# --------------------------------------------------------------------------
def _choose_tiling(batch):
    """Ceil-div batch tiling: <= 8 wasted rows per tile (not up-to-TB), tile cap
    1024 rows, and >= 2 grid steps for medium batches (v7x megacore)."""
    b8 = _round_up(max(batch, 1), 8)
    if b8 <= 128:
        return b8, 1
    n_tiles = max(2, pl.cdiv(b8, 1024))
    tb = _round_up(pl.cdiv(b8, n_tiles), 8)
    n_tiles = pl.cdiv(b8, tb)
    return tb, n_tiles


def multiclass_forward(x, w1p, b1p, w2p, b2p):
    """x: (B, 8) f32, params from prepare_params -> (B, 40) f32."""
    B = x.shape[0]
    TB, n_tiles = _choose_tiling(B)
    B_full = TB * n_tiles
    xp = x if B_full == B else jnp.pad(x, ((0, B_full - B), (0, 0)))

    kernel = mlp_kernel_vpu if _USE_VPU_LAYER1 else mlp_kernel_mxu

    flops = 2 * B_full * (IN_FEATURES * HIDDEN_PAD + HIDDEN_PAD * OUT_FEATURES)
    bytes_accessed = int(xp.size * 4 + w1p.size * 2 + w2p.size * 2
                         + b1p.size * 4 + b2p.size * 4
                         + B_full * OUT_FEATURES * 4)

    out = pl.pallas_call(
        kernel,
        out_shape=jax.ShapeDtypeStruct((B_full, OUT_FEATURES), jnp.float32),
        grid=(n_tiles,),
        in_specs=[
            # x: blocked over batch rows
            pl.BlockSpec((TB, IN_FEATURES), lambda i: (i, 0)),
            # weights / biases: constant block index -> DMA'd once, VMEM-resident
            pl.BlockSpec((IN_FEATURES, HIDDEN_PAD), lambda i: (0, 0)),
            pl.BlockSpec((1, HIDDEN_PAD), lambda i: (0, 0)),
            pl.BlockSpec((HIDDEN_PAD, OUT_FEATURES), lambda i: (0, 0)),
            pl.BlockSpec((1, OUT_FEATURES), lambda i: (0, 0)),
        ],
        # 40 == full array dim -> legal block; no 128-wide padded writeback,
        # no post-kernel slice pass.
        out_specs=pl.BlockSpec((TB, OUT_FEATURES), lambda i: (i, 0)),
        compiler_params=pltpu.CompilerParams(
            dimension_semantics=("parallel",),
            vmem_limit_bytes=48 << 20,
        ),
        cost_estimate=pl.CostEstimate(
            flops=flops, transcendentals=0, bytes_accessed=bytes_accessed),
    )(xp, w1p, b1p, w2p, b2p)

    return out if B_full == B else out[:B]


# --------------------------------------------------------------------------
# Init + self-test
# --------------------------------------------------------------------------
def init_params(key):
    """PyTorch nn.Linear-style init (U(-k, k), k = 1/sqrt(fan_in)); stored as
    (in, out) for x @ W."""
    k1, k2, k3, k4 = jax.random.split(key, 4)
    lim1 = 1.0 / jnp.sqrt(IN_FEATURES)
    lim2 = 1.0 / jnp.sqrt(HIDDEN)
    w1 = jax.random.uniform(k1, (IN_FEATURES, HIDDEN), jnp.float32, -lim1, lim1)
    b1 = jax.random.uniform(k2, (HIDDEN,), jnp.float32, -lim1, lim1)
    w2 = jax.random.uniform(k3, (HIDDEN, OUT_FEATURES), jnp.float32, -lim2, lim2)
    b2 = jax.random.uniform(k4, (OUT_FEATURES,), jnp.float32, -lim2, lim2)
    return w1, b1, w2, b2


if __name__ == "__main__":
    key = jax.random.PRNGKey(0)
    kx, kp = jax.random.split(key)

    B = 8
    x = jax.random.normal(kx, (B, IN_FEATURES), jnp.float32)
    w1, b1, w2, b2 = init_params(kp)

    # One-time parameter prep (hoisted out of the forward pass).
    params = jax.block_until_ready(prepare_params(w1, b1, w2, b2))

    fwd = jax.jit(multiclass_forward)
    out = jax.block_until_ready(fwd(x, *params))

    # Reference: pure f32 math (the original PyTorch module semantics).
    # NOTE: kernel feeds the MXU in bf16 (documented precision choice), so a
    # modest tolerance vs. the f32 reference is expected (~1e-3 abs here).
    ref_f32 = jnp.maximum(x @ w1 + b1, 0.0) @ w2 + b2

    assert out.shape == (B, OUT_FEATURES)
    assert jnp.allclose(out, ref_f32, atol=2e-2, rtol=2e-2), \
        float(jnp.max(jnp.abs(out - ref_f32)))

    print("KERNEL_OK")
</pallas_src>

<mosaic_0001>
module attributes {stable_mosaic.version = 11 : i64} {
  func.func @mlp_kernel_mxu(%arg0: i32, %arg1: memref<8x8xf32, #tpu.memory_space<vmem>>, %arg2: memref<8x1664xbf16, #tpu.memory_space<vmem>>, %arg3: memref<1x1664xf32, #tpu.memory_space<vmem>>, %arg4: memref<1664x40xbf16, #tpu.memory_space<vmem>>, %arg5: memref<1x40xf32, #tpu.memory_space<vmem>>, %arg6: memref<8x40xf32, #tpu.memory_space<vmem>>) attributes {dimension_semantics = [#tpu.dimension_semantics<parallel>], iteration_bounds = array<i64: 1>, scalar_prefetch = 0 : i64, scratch_operands = 0 : i64, tpu.core_type = #tpu.core_type<tc>, window_params = [{transform_indices = @transform_0, window_bounds = array<i64: 8, 8>}, {pipeline_mode = #tpu.pipeline_mode<synchronous>, transform_indices = @transform_1, window_bounds = array<i64: 8, 1664>}, {pipeline_mode = #tpu.pipeline_mode<synchronous>, transform_indices = @transform_2, window_bounds = array<i64: 1, 1664>}, {pipeline_mode = #tpu.pipeline_mode<synchronous>, transform_indices = @transform_3, window_bounds = array<i64: 1664, 40>}, {pipeline_mode = #tpu.pipeline_mode<synchronous>, transform_indices = @transform_4, window_bounds = array<i64: 1, 40>}, {transform_indices = @transform_5, window_bounds = array<i64: 8, 40>}]} {
    %c0 = arith.constant 0 : index
    %c0_0 = arith.constant 0 : index
    %0 = vector.load %arg1[%c0, %c0_0] : memref<8x8xf32, #tpu.memory_space<vmem>>, vector<8x8xf32>
    %1 = arith.truncf %0 : vector<8x8xf32> to vector<8x8xbf16>
    %c0_1 = arith.constant 0 : index
    %c0_2 = arith.constant 0 : index
    %2 = vector.load %arg2[%c0_1, %c0_2] : memref<8x1664xbf16, #tpu.memory_space<vmem>>, vector<8x1664xbf16>
    %cst = arith.constant dense<0.000000e+00> : vector<8x1664xf32>
    %3 = tpu.matmul %1, %2, %cst {dimension_numbers = #tpu.dot_dimension_numbers<[1], [0], [0], [1], [0, 0, 1, 1], [], []>} : vector<8x8xbf16>, vector<8x1664xbf16>, vector<8x1664xf32> -> vector<8x1664xf32>
    %c0_3 = arith.constant 0 : index
    %c0_4 = arith.constant 0 : index
    %4 = vector.load %arg3[%c0_3, %c0_4] : memref<1x1664xf32, #tpu.memory_space<vmem>>, vector<1x1664xf32>
    %5 = vector.broadcast %4 : vector<1x1664xf32> to vector<8x1664xf32>
    %6 = arith.addf %3, %5 : vector<8x1664xf32>
    %cst_5 = arith.constant 0.000000e+00 : f32
    %7 = vector.broadcast %cst_5 : f32 to vector<8x1664xf32>
    %8 = arith.maximumf %6, %7 : vector<8x1664xf32>
    %9 = arith.truncf %8 : vector<8x1664xf32> to vector<8x1664xbf16>
    %c0_6 = arith.constant 0 : index
    %c0_7 = arith.constant 0 : index
    %10 = vector.load %arg4[%c0_6, %c0_7] : memref<1664x40xbf16, #tpu.memory_space<vmem>>, vector<1664x40xbf16>
    %cst_8 = arith.constant dense<0.000000e+00> : vector<8x40xf32>
    %11 = tpu.matmul %9, %10, %cst_8 {dimension_numbers = #tpu.dot_dimension_numbers<[1], [0], [0], [1], [0, 0, 1, 1], [], []>} : vector<8x1664xbf16>, vector<1664x40xbf16>, vector<8x40xf32> -> vector<8x40xf32>
    %c0_9 = arith.constant 0 : index
    %c0_10 = arith.constant 0 : index
    %12 = vector.load %arg5[%c0_9, %c0_10] : memref<1x40xf32, #tpu.memory_space<vmem>>, vector<1x40xf32>
    %13 = vector.broadcast %12 : vector<1x40xf32> to vector<8x40xf32>
    %14 = arith.addf %11, %13 : vector<8x40xf32>
    %c0_11 = arith.constant 0 : index
    %c0_12 = arith.constant 0 : index
    %15 = vector.load %arg6[%c0_11, %c0_12] : memref<8x40xf32, #tpu.memory_space<vmem>>, vector<8x40xf32>
    tpu.vector_store %arg6[%c0_11, %c0_12], %14 {strides = array<i32>} : memref<8x40xf32, #tpu.memory_space<vmem>>, vector<8x40xf32>,
    return
  }
  func.func @transform_0(%arg0: i32) -> (i32, i32) {
    %c0_i32 = arith.constant 0 : i32
    %c0_i32_0 = arith.constant 0 : i32
    return %arg0, %c0_i32 : i32, i32
  }
  func.func @transform_1(%arg0: i32) -> (i32, i32) {
    %c0_i32 = arith.constant 0 : i32
    %c0_i32_0 = arith.constant 0 : i32
    %c0_i32_1 = arith.constant 0 : i32
    return %c0_i32, %c0_i32_0 : i32, i32
  }
  func.func @transform_2(%arg0: i32) -> (i32, i32) {
    %c0_i32 = arith.constant 0 : i32
    %c0_i32_0 = arith.constant 0 : i32
    %c0_i32_1 = arith.constant 0 : i32
    return %c0_i32, %c0_i32_0 : i32, i32
  }
  func.func @transform_3(%arg0: i32) -> (i32, i32) {
    %c0_i32 = arith.constant 0 : i32
    %c0_i32_0 = arith.constant 0 : i32
    %c0_i32_1 = arith.constant 0 : i32
    return %c0_i32, %c0_i32_0 : i32, i32
  }
  func.func @transform_4(%arg0: i32) -> (i32, i32) {
    %c0_i32 = arith.constant 0 : i32
    %c0_i32_0 = arith.constant 0 : i32
    %c0_i32_1 = arith.constant 0 : i32
    return %c0_i32, %c0_i32_0 : i32, i32
  }
  func.func @transform_5(%arg0: i32) -> (i32, i32) {
    %c0_i32 = arith.constant 0 : i32
    %c0_i32_0 = arith.constant 0 : i32
    return %arg0, %c0_i32 : i32, i32
  }
}

</mosaic_0001>

<llo_original>
// kernel: multiclass_forward.1
$region0: #{multiclass_forward.1}
  #allocation0 [shape = 'u32[]', space=smem, size = 0x4, offset = 0x4, fixed_abs, tag = 'smem constant byte address 0x4 - core index']
  #allocation1 [shape = 'u32[72,128]{1,0:T(1,128)}', space=vmem, size = 0x9000, scoped, tag = 'internal scratch']
  %s0 = inlined_call_operand.vmem [shape: f32[8,8], index: 0, kind: input, shape index: {}]
  %s1 = inlined_call_operand.vmem [shape: bf16[8,1664], index: 1, kind: input, shape index: {}]
  %s2 = inlined_call_operand.vmem [shape: f32[1,1664], index: 2, kind: input, shape index: {}]
  %s3 = inlined_call_operand.vmem [shape: bf16[1664,40], index: 3, kind: input, shape index: {}]
  %s4 = inlined_call_operand.vmem [shape: f32[1,40], index: 4, kind: input, shape index: {}]
  %s5 = inlined_call_operand.hbm [shape: f32[8,40], index: 5, kind: output, shape index: {}]
  %s6 = sld [smem:[#allocation0]]
  $region30: #{multiclass_forward.1} parent=0
    _
  %s8 = ssub.s32 1, %s6
  %s9 = scalar_select 0, %s8, %s6
  $region1: #{multiclass_forward.1} parent=0
    #allocation2 [shape = 'u8[4096]{0}', space=vmem, size = 0x1000, scoped, tag = 'output window, operand 0, single buffered']
    #allocation3 [shape = 's32[1]{0}', space=sflag, size = 0x4, scoped, tag = 'scoped memory for multiclass_forward.1']
    %10 = vsyncpa [#allocation3], 0
    // Predicated region
    $region2: #{multiclass_forward.1} parent=1 // pred_check
      _
    $region3: #{multiclass_forward.1} parent=1 // pred_check_branch
      %12 = sbr.rel (0) target = $region5
    $region4: #{multiclass_forward.1} parent=1 // pred_region
      _
    $region5: #{multiclass_forward.1} parent=1 // pred_fallthru
      _
    // Predicated region
    $region6: #{multiclass_forward.1} parent=1 // pred_check
      _
    $region7: #{multiclass_forward.1} parent=1 // pred_check_branch
      %14 = sbr.rel (0) target = $region9
    $region8: #{multiclass_forward.1} parent=1 // pred_region
      _
    $region9: #{multiclass_forward.1} parent=1 // pred_fallthru
      _
    // Predicated region
    $region10: #{multiclass_forward.1} parent=1 // pred_check
      _
    $region11: #{multiclass_forward.1} parent=1 // pred_check_branch
      %16 = sbr.rel (0) target = $region13
    $region12: #{multiclass_forward.1} parent=1 // pred_region
      _
    $region13: #{multiclass_forward.1} parent=1 // pred_fallthru
      _
    // Predicated region
    $region14: #{multiclass_forward.1} parent=1 // pred_check
      _
    $region15: #{multiclass_forward.1} parent=1 // pred_check_branch
      %18 = sbr.rel (0) target = $region17
    $region16: #{multiclass_forward.1} parent=1 // pred_region
      _
    $region17: #{multiclass_forward.1} parent=1 // pred_fallthru
      _
    // Predicated region
    $region18: #{multiclass_forward.1} parent=1 // pred_check
      _
    $region19: #{multiclass_forward.1} parent=1 // pred_check_branch
      %20 = sbr.rel (0) target = $region21
    $region20: #{multiclass_forward.1} parent=1 // pred_region
      _
    $region21: #{multiclass_forward.1} parent=1 // pred_fallthru
      _
    %v22 = vld [vmem:[%s0] sm:$0xff]
    %v23 = vpack.c.bf16 %v22, %v22
    %v24 = vld [vmem:[%s1] sm:$0xff]
    %v25 = vld [vmem:[%s1 + $0x8] sm:$0xff]
    %v26 = vld [vmem:[%s1 + $0x10] sm:$0xff]
    %v27 = vld [vmem:[%s1 + $0x18] sm:$0xff]
    %v28 = vld [vmem:[%s1 + $0x20] sm:$0xff]
    %v29 = vld [vmem:[%s1 + $0x28] sm:$0xff]
    %v30 = vld [vmem:[%s1 + $0x30] sm:$0xf]
    %v31 = vld [vmem:[%s2] sm:$0xff]
    %v32 = vld [vmem:[%s2 + $0x8] sm:$0x1f]
    %v35 = vperm.slane %v31, 0
    %v36 = vperm.slane %v31, 1
    %v37 = vperm.slane %v31, 2
    %v38 = vperm.slane %v31, 3
    %v39 = vperm.slane %v31, 4
    %v40 = vperm.slane %v31, 5
    %v41 = vperm.slane %v31, 6
    %v42 = vperm.slane %v31, 7
    %v43 = vperm.slane %v32, 0
    %v44 = vperm.slane %v32, 1
    %v45 = vperm.slane %v32, 2
    %v46 = vperm.slane %v32, 3
    %v47 = vperm.slane %v32, 4
    %v68 = vunpack.c.l.b16 %v24
    %v69 = vunpack.c.h.b16 %v24
    %v70 = vunpack.c.l.b16 %v25
    %v71 = vunpack.c.h.b16 %v25
    %v72 = vunpack.c.l.b16 %v26
    %v73 = vunpack.c.h.b16 %v26
    %v74 = vunpack.c.l.b16 %v27
    %v75 = vunpack.c.h.b16 %v27
    %v76 = vunpack.c.l.b16 %v28
    %v77 = vunpack.c.h.b16 %v28
    %v78 = vunpack.c.l.b16 %v29
    %v79 = vunpack.c.h.b16 %v29
    %v80 = vunpack.c.l.b16 %v30
    %v81 = vpack.c.b16 %v68, %v68
    %v82 = vpack.c.b16 %v69, %v69
    %v83 = vpack.c.b16 %v70, %v70
    %v84 = vpack.c.b16 %v71, %v71
    %v85 = vpack.c.b16 %v72, %v72
    %v86 = vpack.c.b16 %v73, %v73
    %v87 = vpack.c.b16 %v74, %v74
    %v88 = vpack.c.b16 %v75, %v75
    %v89 = vpack.c.b16 %v76, %v76
    %v90 = vpack.c.b16 %v77, %v77
    %v91 = vpack.c.b16 %v78, %v78
    %v92 = vpack.c.b16 %v79, %v79
    %v93 = vpack.c.b16 %v80, %v80
    %vm94 = vcmask 64512
    %v96 = vsel %vm94, %v23, 0
    %vm98 = vcmask 1043456
    %v100 = vsel %vm98, %v81, 0
    %v103 = vsel %vm98, %v82, 0
    %v106 = vsel %vm98, %v83, 0
    %v109 = vsel %vm98, %v84, 0
    %v112 = vsel %vm98, %v85, 0
    %v115 = vsel %vm98, %v86, 0
    %v118 = vsel %vm98, %v87, 0
    %v121 = vsel %vm98, %v88, 0
    %v124 = vsel %vm98, %v89, 0
    %v127 = vsel %vm98, %v90, 0
    %v130 = vsel %vm98, %v91, 0
    %v133 = vsel %vm98, %v92, 0
    %v136 = vsel %vm98, %v93, 0
    %138 = vmatpush.bf16.msra.mxu0 0
    %139 = vmatpush.bf16.msra.mxu0 0
    %140 = vmatpush.bf16.msra.mxu0 0
    %141 = vmatpush.bf16.msra.mxu0 0
    %142 = vmatpush.bf16.msra.mxu0 0
    %143 = vmatpush.bf16.msra.mxu0 0
    %144 = vmatpush.bf16.msra.mxu0 0
    %145 = vmatpush.bf16.msra.mxu0 %v100
    %146 = vmatmul.bf16.gmra.mxu0 %v96
    %v147 = vpop.f32.mrf.mxu0
    %v148 = vadd.f32 %v35, %v147
    %v149 = vpop.f32.mrf.mxu0
    %150 = vdwg.mxu0
    %151 = vmatpush.bf16.msra.mxu0 0
    %152 = vmatpush.bf16.msra.mxu0 0
    %153 = vmatpush.bf16.msra.mxu0 0
    %154 = vmatpush.bf16.msra.mxu0 0
    %155 = vmatpush.bf16.msra.mxu0 0
    %156 = vmatpush.bf16.msra.mxu0 0
    %157 = vmatpush.bf16.msra.mxu0 0
    %158 = vmatpush.bf16.msra.mxu0 %v103
    %159 = vmatmul.bf16.gmra.mxu0 %v96
    %v160 = vpop.f32.mrf.mxu0
    %v161 = vadd.f32 %v36, %v160
    %v162 = vpop.f32.mrf.mxu0
    %163 = vdwg.mxu0
    %164 = vmatpush.bf16.msra.mxu0 0
    %165 = vmatpush.bf16.msra.mxu0 0
    %166 = vmatpush.bf16.msra.mxu0 0
    %167 = vmatpush.bf16.msra.mxu0 0
    %168 = vmatpush.bf16.msra.mxu0 0
    %169 = vmatpush.bf16.msra.mxu0 0
    %170 = vmatpush.bf16.msra.mxu0 0
    %171 = vmatpush.bf16.msra.mxu0 %v106
    %172 = vmatmul.bf16.gmra.mxu0 %v96
    %v173 = vpop.f32.mrf.mxu0
    %v174 = vadd.f32 %v37, %v173
    %v175 = vpop.f32.mrf.mxu0
    %176 = vdwg.mxu0
    %177 = vmatpush.bf16.msra.mxu0 0
    %178 = vmatpush.bf16.msra.mxu0 0
    %179 = vmatpush.bf16.msra.mxu0 0
    %180 = vmatpush.bf16.msra.mxu0 0
    %181 = vmatpush.bf16.msra.mxu0 0
    %182 = vmatpush.bf16.msra.mxu0 0
    %183 = vmatpush.bf16.msra.mxu0 0
    %184 = vmatpush.bf16.msra.mxu0 %v109
    %185 = vmatmul.bf16.gmra.mxu0 %v96
    %v186 = vpop.f32.mrf.mxu0
    %v187 = vadd.f32 %v38, %v186
    %v188 = vpop.f32.mrf.mxu0
    %189 = vdwg.mxu0
    %190 = vmatpush.bf16.msra.mxu0 0
    %191 = vmatpush.bf16.msra.mxu0 0
    %192 = vmatpush.bf16.msra.mxu0 0
    %193 = vmatpush.bf16.msra.mxu0 0
    %194 = vmatpush.bf16.msra.mxu0 0
    %195 = vmatpush.bf16.msra.mxu0 0
    %196 = vmatpush.bf16.msra.mxu0 0
    %197 = vmatpush.bf16.msra.mxu0 %v112
    %198 = vmatmul.bf16.gmra.mxu0 %v96
    %v199 = vpop.f32.mrf.mxu0
    %v200 = vadd.f32 %v39, %v199
    %v201 = vpop.f32.mrf.mxu0
    %202 = vdwg.mxu0
    %203 = vmatpush.bf16.msra.mxu0 0
    %204 = vmatpush.bf16.msra.mxu0 0
    %205 = vmatpush.bf16.msra.mxu0 0
    %206 = vmatpush.bf16.msra.mxu0 0
    %207 = vmatpush.bf16.msra.mxu0 0
    %208 = vmatpush.bf16.msra.mxu0 0
    %209 = vmatpush.bf16.msra.mxu0 0
    %210 = vmatpush.bf16.msra.mxu0 %v115
    %211 = vmatmul.bf16.gmra.mxu0 %v96
    %v212 = vpop.f32.mrf.mxu0
    %v213 = vadd.f32 %v40, %v212
    %v214 = vpop.f32.mrf.mxu0
    %215 = vdwg.mxu0
    %216 = vmatpush.bf16.msra.mxu0 0
    %217 = vmatpush.bf16.msra.mxu0 0
    %218 = vmatpush.bf16.msra.mxu0 0
    %219 = vmatpush.bf16.msra.mxu0 0
    %220 = vmatpush.bf16.msra.mxu0 0
    %221 = vmatpush.bf16.msra.mxu0 0
    %222 = vmatpush.bf16.msra.mxu0 0
    %223 = vmatpush.bf16.msra.mxu0 %v118
    %224 = vmatmul.bf16.gmra.mxu0 %v96
    %v225 = vpop.f32.mrf.mxu0
    %v226 = vadd.f32 %v41, %v225
    %v227 = vpop.f32.mrf.mxu0
    %228 = vdwg.mxu0
    %229 = vmatpush.bf16.msra.mxu0 0
    %230 = vmatpush.bf16.msra.mxu0 0
    %231 = vmatpush.bf16.msra.mxu0 0
    %232 = vmatpush.bf16.msra.mxu0 0
    %233 = vmatpush.bf16.msra.mxu0 0
    %234 = vmatpush.bf16.msra.mxu0 0
    %235 = vmatpush.bf16.msra.mxu0 0
    %236 = vmatpush.bf16.msra.mxu0 %v121
    %237 = vmatmul.bf16.gmra.mxu0 %v96
    %v238 = vpop.f32.mrf.mxu0
    %v239 = vadd.f32 %v42, %v238
    %v240 = vpop.f32.mrf.mxu0
    %241 = vdwg.mxu0
    %242 = vmatpush.bf16.msra.mxu0 0
    %243 = vmatpush.bf16.msra.mxu0 0
    %244 = vmatpush.bf16.msra.mxu0 0
    %245 = vmatpush.bf16.msra.mxu0 0
    %246 = vmatpush.bf16.msra.mxu0 0
    %247 = vmatpush.bf16.msra.mxu0 0
    %248 = vmatpush.bf16.msra.mxu0 0
    %249 = vmatpush.bf16.msra.mxu0 %v124
    %250 = vmatmul.bf16.gmra.mxu0 %v96
    %v251 = vpop.f32.mrf.mxu0
    %v252 = vadd.f32 %v43, %v251
    %v253 = vpop.f32.mrf.mxu0
    %254 = vdwg.mxu0
    %255 = vmatpush.bf16.msra.mxu0 0
    %256 = vmatpush.bf16.msra.mxu0 0
    %257 = vmatpush.bf16.msra.mxu0 0
    %258 = vmatpush.bf16.msra.mxu0 0
    %259 = vmatpush.bf16.msra.mxu0 0
    %260 = vmatpush.bf16.msra.mxu0 0
    %261 = vmatpush.bf16.msra.mxu0 0
    %262 = vmatpush.bf16.msra.mxu0 %v127
    %263 = vmatmul.bf16.gmra.mxu0 %v96
    %v264 = vpop.f32.mrf.mxu0
    %v265 = vadd.f32 %v44, %v264
    %v266 = vpop.f32.mrf.mxu0
    %267 = vdwg.mxu0
    %268 = vmatpush.bf16.msra.mxu0 0
    %269 = vmatpush.bf16.msra.mxu0 0
    %270 = vmatpush.bf16.msra.mxu0 0
    %271 = vmatpush.bf16.msra.mxu0 0
    %272 = vmatpush.bf16.msra.mxu0 0
    %273 = vmatpush.bf16.msra.mxu0 0
    %274 = vmatpush.bf16.msra.mxu0 0
    %275 = vmatpush.bf16.msra.mxu0 %v130
    %276 = vmatmul.bf16.gmra.mxu0 %v96
    %v277 = vpop.f32.mrf.mxu0
    %v278 = vadd.f32 %v45, %v277
    %v279 = vpop.f32.mrf.mxu0
    %280 = vdwg.mxu0
    %281 = vmatpush.bf16.msra.mxu0 0
    %282 = vmatpush.bf16.msra.mxu0 0
    %283 = vmatpush.bf16.msra.mxu0 0
    %284 = vmatpush.bf16.msra.mxu0 0
    %285 = vmatpush.bf16.msra.mxu0 0
    %286 = vmatpush.bf16.msra.mxu0 0
    %287 = vmatpush.bf16.msra.mxu0 0
    %288 = vmatpush.bf16.msra.mxu0 %v133
    %289 = vmatmul.bf16.gmra.mxu0 %v96
    %v290 = vpop.f32.mrf.mxu0
    %v291 = vadd.f32 %v46, %v290
    %v292 = vpop.f32.mrf.mxu0
    %293 = vdwg.mxu0
    %294 = vmatpush.bf16.msra.mxu0 0
    %295 = vmatpush.bf16.msra.mxu0 0
    %296 = vmatpush.bf16.msra.mxu0 0
    %297 = vmatpush.bf16.msra.mxu0 0
    %298 = vmatpush.bf16.msra.mxu0 0
    %299 = vmatpush.bf16.msra.mxu0 0
    %300 = vmatpush.bf16.msra.mxu0 0
    %301 = vmatpush.bf16.msra.mxu0 %v136
    %302 = vmatmul.bf16.gmra.mxu0 %v96
    %v303 = vpop.f32.mrf.mxu0
    %v304 = vadd.f32 %v47, %v303
    %v305 = vpop.f32.mrf.mxu0
    %306 = vdwg.mxu0
    %v307 = vmax.f32 %v148, 0.0
    %v308 = vmax.f32 %v161, 0.0
    %v309 = vmax.f32 %v174, 0.0
    %v310 = vmax.f32 %v187, 0.0
    %v311 = vmax.f32 %v200, 0.0
    %v312 = vmax.f32 %v213, 0.0
    %v313 = vmax.f32 %v226, 0.0
    %v314 = vmax.f32 %v239, 0.0
    %v315 = vmax.f32 %v252, 0.0
    %v316 = vmax.f32 %v265, 0.0
    %v317 = vmax.f32 %v278, 0.0
    %v318 = vmax.f32 %v291, 0.0
    %v319 = vmax.f32 %v304, 0.0
    %v320 = vpack.c.bf16 %v307, %v307
    %v321 = vpack.c.bf16 %v308, %v308
    %v322 = vpack.c.bf16 %v309, %v309
    %v323 = vpack.c.bf16 %v310, %v310
    %v324 = vpack.c.bf16 %v311, %v311
    %v325 = vpack.c.bf16 %v312, %v312
    %v326 = vpack.c.bf16 %v313, %v313
    %v327 = vpack.c.bf16 %v314, %v314
    %v328 = vpack.c.bf16 %v315, %v315
    %v329 = vpack.c.bf16 %v316, %v316
    %v330 = vpack.c.bf16 %v317, %v317
    %v331 = vpack.c.bf16 %v318, %v318
    %v332 = vpack.c.bf16 %v319, %v319
    %v333 = vld [vmem:[%s3] sm:$0xf]
    %v334 = vld [vmem:[%s3 + $0x4] sm:$0xf]
    %v335 = vld [vmem:[%s3 + $0x8] sm:$0xf]
    %v336 = vld [vmem:[%s3 + $0xc] sm:$0xf]
    %v337 = vld [vmem:[%s3 + $0x10] sm:$0xf]
    %v338 = vld [vmem:[%s3 + $0x14] sm:$0xf]
    %v339 = vld [vmem:[%s3 + $0x18] sm:$0xf]
    %v340 = vld [vmem:[%s3 + $0x1c] sm:$0xf]
    %v341 = vld [vmem:[%s3 + $0x20] sm:$0xf]
    %v342 = vld [vmem:[%s3 + $0x24] sm:$0xf]
    %v343 = vld [vmem:[%s3 + $0x28] sm:$0xf]
    %v344 = vld [vmem:[%s3 + $0x2c] sm:$0xf]
    %v345 = vld [vmem:[%s3 + $0x30] sm:$0xf]
    %v346 = vld [vmem:[%s3 + $0x34] sm:$0xf]
    %v347 = vld [vmem:[%s3 + $0x38] sm:$0xf]
    %v348 = vld [vmem:[%s3 + $0x3c] sm:$0xf]
    %v349 = vld [vmem:[%s3 + $0x40] sm:$0xf]
    %v350 = vld [vmem:[%s3 + $0x44] sm:$0xf]
    %v351 = vld [vmem:[%s3 + $0x48] sm:$0xf]
    %v352 = vld [vmem:[%s3 + $0x4c] sm:$0xf]
    %v353 = vld [vmem:[%s3 + $0x50] sm:$0xf]
    %v354 = vld [vmem:[%s3 + $0x54] sm:$0xf]
    %v355 = vld [vmem:[%s3 + $0x58] sm:$0xf]
    %v356 = vld [vmem:[%s3 + $0x5c] sm:$0xf]
    %v357 = vld [vmem:[%s3 + $0x60] sm:$0xf]
    %v358 = vld [vmem:[%s3 + $0x64] sm:$0xf]
    %v359 = vld [vmem:[%s3 + $0x68] sm:$0xf]
    %v360 = vld [vmem:[%s3 + $0x6c] sm:$0xf]
    %v361 = vld [vmem:[%s3 + $0x70] sm:$0xf]
    %v362 = vld [vmem:[%s3 + $0x74] sm:$0xf]
    %v363 = vld [vmem:[%s3 + $0x78] sm:$0xf]
    %v364 = vld [vmem:[%s3 + $0x7c] sm:$0xf]
    %v365 = vld [vmem:[%s3 + $0x80] sm:$0xf]
    %v366 = vld [vmem:[%s3 + $0x84] sm:$0xf]
    %v367 = vld [vmem:[%s3 + $0x88] sm:$0xf]
    %v368 = vld [vmem:[%s3 + $0x8c] sm:$0xf]
    %v369 = vld [vmem:[%s3 + $0x90] sm:$0xf]
    %v370 = vld [vmem:[%s3 + $0x94] sm:$0xf]
    %v371 = vld [vmem:[%s3 + $0x98] sm:$0xf]
    %v372 = vld [vmem:[%s3 + $0x9c] sm:$0xf]
    %v373 = vld [vmem:[%s3 + $0xa0] sm:$0xf]
    %v374 = vld [vmem:[%s3 + $0xa4] sm:$0xf]
    %v375 = vld [vmem:[%s3 + $0xa8] sm:$0xf]
    %v376 = vld [vmem:[%s3 + $0xac] sm:$0xf]
    %v377 = vld [vmem:[%s3 + $0xb0] sm:$0xf]
    %v378 = vld [vmem:[%s3 + $0xb4] sm:$0xf]
    %v379 = vld [vmem:[%s3 + $0xb8] sm:$0xf]
    %v380 = vld [vmem:[%s3 + $0xbc] sm:$0xf]
    %v381 = vld [vmem:[%s3 + $0xc0] sm:$0xf]
    %v382 = vld [vmem:[%s3 + $0xc4] sm:$0xf]
    %v383 = vld [vmem:[%s3 + $0xc8] sm:$0xf]
    %v384 = vld [vmem:[%s3 + $0xcc] sm:$0xf]
    %v385 = vld [vmem:[%s3 + $0xd0] sm:$0xf]
    %v386 = vld [vmem:[%s3 + $0xd4] sm:$0xf]
    %v387 = vld [vmem:[%s3 + $0xd8] sm:$0xf]
    %v388 = vld [vmem:[%s3 + $0xdc] sm:$0xf]
    %v389 = vld [vmem:[%s3 + $0xe0] sm:$0xf]
    %v390 = vld [vmem:[%s3 + $0xe4] sm:$0xf]
    %v391 = vld [vmem:[%s3 + $0xe8] sm:$0xf]
    %v392 = vld [vmem:[%s3 + $0xec] sm:$0xf]
    %v393 = vld [vmem:[%s3 + $0xf0] sm:$0xf]
    %v394 = vld [vmem:[%s3 + $0xf4] sm:$0xf]
    %v395 = vld [vmem:[%s3 + $0xf8] sm:$0xf]
    %v396 = vld [vmem:[%s3 + $0xfc] sm:$0xf]
    %v397 = vld [vmem:[%s3 + $0x100] sm:$0xf]
    %v398 = vld [vmem:[%s3 + $0x104] sm:$0xf]
    %v399 = vld [vmem:[%s3 + $0x108] sm:$0xf]
    %v400 = vld [vmem:[%s3 + $0x10c] sm:$0xf]
    %v401 = vld [vmem:[%s3 + $0x110] sm:$0xf]
    %v402 = vld [vmem:[%s3 + $0x114] sm:$0xf]
    %v403 = vld [vmem:[%s3 + $0x118] sm:$0xf]
    %v404 = vld [vmem:[%s3 + $0x11c] sm:$0xf]
    %v405 = vld [vmem:[%s3 + $0x120] sm:$0xf]
    %v406 = vld [vmem:[%s3 + $0x124] sm:$0xf]
    %v407 = vld [vmem:[%s3 + $0x128] sm:$0xf]
    %v408 = vld [vmem:[%s3 + $0x12c] sm:$0xf]
    %v409 = vld [vmem:[%s3 + $0x130] sm:$0xf]
    %v410 = vld [vmem:[%s3 + $0x134] sm:$0xf]
    %v411 = vld [vmem:[%s3 + $0x138] sm:$0xf]
    %v412 = vld [vmem:[%s3 + $0x13c] sm:$0xf]
    %v413 = vld [vmem:[%s3 + $0x140] sm:$0xf]
    %v414 = vld [vmem:[%s3 + $0x144] sm:$0xf]
    %v415 = vld [vmem:[%s3 + $0x148] sm:$0xf]
    %v416 = vld [vmem:[%s3 + $0x14c] sm:$0xf]
    %v417 = vld [vmem:[%s3 + $0x150] sm:$0xf]
    %v418 = vld [vmem:[%s3 + $0x154] sm:$0xf]
    %v419 = vld [vmem:[%s3 + $0x158] sm:$0xf]
    %v420 = vld [vmem:[%s3 + $0x15c] sm:$0xf]
    %v421 = vld [vmem:[%s3 + $0x160] sm:$0xf]
    %v422 = vld [vmem:[%s3 + $0x164] sm:$0xf]
    %v423 = vld [vmem:[%s3 + $0x168] sm:$0xf]
    %v424 = vld [vmem:[%s3 + $0x16c] sm:$0xf]
    %v425 = vld [vmem:[%s3 + $0x170] sm:$0xf]
    %v426 = vld [vmem:[%s3 + $0x174] sm:$0xf]
    %v427 = vld [vmem:[%s3 + $0x178] sm:$0xf]
    %v428 = vld [vmem:[%s3 + $0x17c] sm:$0xf]
    %v429 = vld [vmem:[%s3 + $0x180] sm:$0xf]
    %v430 = vld [vmem:[%s3 + $0x184] sm:$0xf]
    %v431 = vld [vmem:[%s3 + $0x188] sm:$0xf]
    %v432 = vld [vmem:[%s3 + $0x18c] sm:$0xf]
    %v433 = vld [vmem:[%s3 + $0x190] sm:$0xf]
    %v434 = vld [vmem:[%s3 + $0x194] sm:$0xf]
    %v435 = vld [vmem:[%s3 + $0x198] sm:$0xf]
    %v436 = vld [vmem:[%s3 + $0x19c] sm:$0xf]
    %v437 = vld [vmem:[%s3 + $0x1a0] sm:$0xf]
    %v438 = vld [vmem:[%s3 + $0x1a4] sm:$0xf]
    %v439 = vld [vmem:[%s3 + $0x1a8] sm:$0xf]
    %v440 = vld [vmem:[%s3 + $0x1ac] sm:$0xf]
    %v441 = vld [vmem:[%s3 + $0x1b0] sm:$0xf]
    %v442 = vld [vmem:[%s3 + $0x1b4] sm:$0xf]
    %v443 = vld [vmem:[%s3 + $0x1b8] sm:$0xf]
    %v444 = vld [vmem:[%s3 + $0x1bc] sm:$0xf]
    %v445 = vld [vmem:[%s3 + $0x1c0] sm:$0xf]
    %v446 = vld [vmem:[%s3 + $0x1c4] sm:$0xf]
    %v447 = vld [vmem:[%s3 + $0x1c8] sm:$0xf]
    %v448 = vld [vmem:[%s3 + $0x1cc] sm:$0xf]
    %v449 = vld [vmem:[%s3 + $0x1d0] sm:$0xf]
    %v450 = vld [vmem:[%s3 + $0x1d4] sm:$0xf]
    %v451 = vld [vmem:[%s3 + $0x1d8] sm:$0xf]
    %v452 = vld [vmem:[%s3 + $0x1dc] sm:$0xf]
    %v453 = vld [vmem:[%s3 + $0x1e0] sm:$0xf]
    %v454 = vld [vmem:[%s3 + $0x1e4] sm:$0xf]
    %v455 = vld [vmem:[%s3 + $0x1e8] sm:$0xf]
    %v456 = vld [vmem:[%s3 + $0x1ec] sm:$0xf]
    %v457 = vld [vmem:[%s3 + $0x1f0] sm:$0xf]
    %v458 = vld [vmem:[%s3 + $0x1f4] sm:$0xf]
    %v459 = vld [vmem:[%s3 + $0x1f8] sm:$0xf]
    %v460 = vld [vmem:[%s3 + $0x1fc] sm:$0xf]
    %v461 = vld [vmem:[%s3 + $0x200] sm:$0xf]
    %v462 = vld [vmem:[%s3 + $0x204] sm:$0xf]
    %v463 = vld [vmem:[%s3 + $0x208] sm:$0xf]
    %v464 = vld [vmem:[%s3 + $0x20c] sm:$0xf]
    %v465 = vld [vmem:[%s3 + $0x210] sm:$0xf]
    %v466 = vld [vmem:[%s3 + $0x214] sm:$0xf]
    %v467 = vld [vmem:[%s3 + $0x218] sm:$0xf]
    %v468 = vld [vmem:[%s3 + $0x21c] sm:$0xf]
    %v469 = vld [vmem:[%s3 + $0x220] sm:$0xf]
    %v470 = vld [vmem:[%s3 + $0x224] sm:$0xf]
    %v471 = vld [vmem:[%s3 + $0x228] sm:$0xf]
    %v472 = vld [vmem:[%s3 + $0x22c] sm:$0xf]
    %v473 = vld [vmem:[%s3 + $0x230] sm:$0xf]
    %v474 = vld [vmem:[%s3 + $0x234] sm:$0xf]
    %v475 = vld [vmem:[%s3 + $0x238] sm:$0xf]
    %v476 = vld [vmem:[%s3 + $0x23c] sm:$0xf]
    %v477 = vld [vmem:[%s3 + $0x240] sm:$0xf]
    %v478 = vld [vmem:[%s3 + $0x244] sm:$0xf]
    %v479 = vld [vmem:[%s3 + $0x248] sm:$0xf]
    %v480 = vld [vmem:[%s3 + $0x24c] sm:$0xf]
    %v481 = vld [vmem:[%s3 + $0x250] sm:$0xf]
    %v482 = vld [vmem:[%s3 + $0x254] sm:$0xf]
    %v483 = vld [vmem:[%s3 + $0x258] sm:$0xf]
    %v484 = vld [vmem:[%s3 + $0x25c] sm:$0xf]
    %v485 = vld [vmem:[%s3 + $0x260] sm:$0xf]
    %v486 = vld [vmem:[%s3 + $0x264] sm:$0xf]
    %v487 = vld [vmem:[%s3 + $0x268] sm:$0xf]
    %v488 = vld [vmem:[%s3 + $0x26c] sm:$0xf]
    %v489 = vld [vmem:[%s3 + $0x270] sm:$0xf]
    %v490 = vld [vmem:[%s3 + $0x274] sm:$0xf]
    %v491 = vld [vmem:[%s3 + $0x278] sm:$0xf]
    %v492 = vld [vmem:[%s3 + $0x27c] sm:$0xf]
    %v493 = vld [vmem:[%s3 + $0x280] sm:$0xf]
    %v494 = vld [vmem:[%s3 + $0x284] sm:$0xf]
    %v495 = vld [vmem:[%s3 + $0x288] sm:$0xf]
    %v496 = vld [vmem:[%s3 + $0x28c] sm:$0xf]
    %v497 = vld [vmem:[%s3 + $0x290] sm:$0xf]
    %v498 = vld [vmem:[%s3 + $0x294] sm:$0xf]
    %v499 = vld [vmem:[%s3 + $0x298] sm:$0xf]
    %v500 = vld [vmem:[%s3 + $0x29c] sm:$0xf]
    %v501 = vld [vmem:[%s3 + $0x2a0] sm:$0xf]
    %v502 = vld [vmem:[%s3 + $0x2a4] sm:$0xf]
    %v503 = vld [vmem:[%s3 + $0x2a8] sm:$0xf]
    %v504 = vld [vmem:[%s3 + $0x2ac] sm:$0xf]
    %v505 = vld [vmem:[%s3 + $0x2b0] sm:$0xf]
    %v506 = vld [vmem:[%s3 + $0x2b4] sm:$0xf]
    %v507 = vld [vmem:[%s3 + $0x2b8] sm:$0xf]
    %v508 = vld [vmem:[%s3 + $0x2bc] sm:$0xf]
    %v509 = vld [vmem:[%s3 + $0x2c0] sm:$0xf]
    %v510 = vld [vmem:[%s3 + $0x2c4] sm:$0xf]
    %v511 = vld [vmem:[%s3 + $0x2c8] sm:$0xf]
    %v512 = vld [vmem:[%s3 + $0x2cc] sm:$0xf]
    %v513 = vld [vmem:[%s3 + $0x2d0] sm:$0xf]
    %v514 = vld [vmem:[%s3 + $0x2d4] sm:$0xf]
    %v515 = vld [vmem:[%s3 + $0x2d8] sm:$0xf]
    %v516 = vld [vmem:[%s3 + $0x2dc] sm:$0xf]
    %v517 = vld [vmem:[%s3 + $0x2e0] sm:$0xf]
    %v518 = vld [vmem:[%s3 + $0x2e4] sm:$0xf]
    %v519 = vld [vmem:[%s3 + $0x2e8] sm:$0xf]
    %v520 = vld [vmem:[%s3 + $0x2ec] sm:$0xf]
    %v521 = vld [vmem:[%s3 + $0x2f0] sm:$0xf]
    %v522 = vld [vmem:[%s3 + $0x2f4] sm:$0xf]
    %v523 = vld [vmem:[%s3 + $0x2f8] sm:$0xf]
    %v524 = vld [vmem:[%s3 + $0x2fc] sm:$0xf]
    %v525 = vld [vmem:[%s3 + $0x300] sm:$0xf]
    %v526 = vld [vmem:[%s3 + $0x304] sm:$0xf]
    %v527 = vld [vmem:[%s3 + $0x308] sm:$0xf]
    %v528 = vld [vmem:[%s3 + $0x30c] sm:$0xf]
    %v529 = vld [vmem:[%s3 + $0x310] sm:$0xf]
    %v530 = vld [vmem:[%s3 + $0x314] sm:$0xf]
    %v531 = vld [vmem:[%s3 + $0x318] sm:$0xf]
    %v532 = vld [vmem:[%s3 + $0x31c] sm:$0xf]
    %v533 = vld [vmem:[%s3 + $0x320] sm:$0xf]
    %v534 = vld [vmem:[%s3 + $0x324] sm:$0xf]
    %v535 = vld [vmem:[%s3 + $0x328] sm:$0xf]
    %v536 = vld [vmem:[%s3 + $0x32c] sm:$0xf]
    %v537 = vld [vmem:[%s3 + $0x330] sm:$0xf]
    %v538 = vld [vmem:[%s3 + $0x334] sm:$0xf]
    %v539 = vld [vmem:[%s3 + $0x338] sm:$0xf]
    %v540 = vld [vmem:[%s3 + $0x33c] sm:$0xf]
    %v541 = vld [vmem:[%s4] sm:$0x1]
    %v543 = vperm.slane %v541, 0
    %v753 = vunpack.c.l.b16 %v333
    %v754 = vunpack.c.l.b16 %v334
    %v755 = vunpack.c.l.b16 %v335
    %v756 = vunpack.c.l.b16 %v336
    %v757 = vunpack.c.l.b16 %v337
    %v758 = vunpack.c.l.b16 %v338
    %v759 = vunpack.c.l.b16 %v339
    %v760 = vunpack.c.l.b16 %v340
    %v761 = vunpack.c.l.b16 %v341
    %v762 = vunpack.c.l.b16 %v342
    %v763 = vunpack.c.l.b16 %v343
    %v764 = vunpack.c.l.b16 %v344
    %v765 = vunpack.c.l.b16 %v345
    %v766 = vunpack.c.l.b16 %v346
    %v767 = vunpack.c.l.b16 %v347
    %v768 = vunpack.c.l.b16 %v348
    %v769 = vunpack.c.l.b16 %v349
    %v770 = vunpack.c.l.b16 %v350
    %v771 = vunpack.c.l.b16 %v351
    %v772 = vunpack.c.l.b16 %v352
    %v773 = vunpack.c.l.b16 %v353
    %v774 = vunpack.c.l.b16 %v354
    %v775 = vunpack.c.l.b16 %v355
    %v776 = vunpack.c.l.b16 %v356
    %v777 = vunpack.c.l.b16 %v357
    %v778 = vunpack.c.l.b16 %v358
    %v779 = vunpack.c.l.b16 %v359
    %v780 = vunpack.c.l.b16 %v360
    %v781 = vunpack.c.l.b16 %v361
    %v782 = vunpack.c.l.b16 %v362
    %v783 = vunpack.c.l.b16 %v363
    %v784 = vunpack.c.l.b16 %v364
    %v785 = vunpack.c.l.b16 %v365
    %v786 = vunpack.c.l.b16 %v366
    %v787 = vunpack.c.l.b16 %v367
    %v788 = vunpack.c.l.b16 %v368
    %v789 = vunpack.c.l.b16 %v369
    %v790 = vunpack.c.l.b16 %v370
    %v791 = vunpack.c.l.b16 %v371
    %v792 = vunpack.c.l.b16 %v372
    %v793 = vunpack.c.l.b16 %v373
    %v794 = vunpack.c.l.b16 %v374
    %v795 = vunpack.c.l.b16 %v375
    %v796 = vunpack.c.l.b16 %v376
    %v797 = vunpack.c.l.b16 %v377
    %v798 = vunpack.c.l.b16 %v378
    %v799 = vunpack.c.l.b16 %v379
    %v800 = vunpack.c.l.b16 %v380
    %v801 = vunpack.c.l.b16 %v381
    %v802 = vunpack.c.l.b16 %v382
    %v803 = vunpack.c.l.b16 %v383
    %v804 = vunpack.c.l.b16 %v384
    %v805 = vunpack.c.l.b16 %v385
    %v806 = vunpack.c.l.b16 %v386
    %v807 = vunpack.c.l.b16 %v387
    %v808 = vunpack.c.l.b16 %v388
    %v809 = vunpack.c.l.b16 %v389
    %v810 = vunpack.c.l.b16 %v390
    %v811 = vunpack.c.l.b16 %v391
    %v812 = vunpack.c.l.b16 %v392
    %v813 = vunpack.c.l.b16 %v393
    %v814 = vunpack.c.l.b16 %v394
    %v815 = vunpack.c.l.b16 %v395
    %v816 = vunpack.c.l.b16 %v396
    %v817 = vunpack.c.l.b16 %v397
    %v818 = vunpack.c.l.b16 %v398
    %v819 = vunpack.c.l.b16 %v399
    %v820 = vunpack.c.l.b16 %v400
    %v821 = vunpack.c.l.b16 %v401
    %v822 = vunpack.c.l.b16 %v402
    %v823 = vunpack.c.l.b16 %v403
    %v824 = vunpack.c.l.b16 %v404
    %v825 = vunpack.c.l.b16 %v405
    %v826 = vunpack.c.l.b16 %v406
    %v827 = vunpack.c.l.b16 %v407
    %v828 = vunpack.c.l.b16 %v408
    %v829 = vunpack.c.l.b16 %v409
    %v830 = vunpack.c.l.b16 %v410
    %v831 = vunpack.c.l.b16 %v411
    %v832 = vunpack.c.l.b16 %v412
    %v833 = vunpack.c.l.b16 %v413
    %v834 = vunpack.c.l.b16 %v414
    %v835 = vunpack.c.l.b16 %v415
    %v836 = vunpack.c.l.b16 %v416
    %v837 = vunpack.c.l.b16 %v417
    %v838 = vunpack.c.l.b16 %v418
    %v839 = vunpack.c.l.b16 %v419
    %v840 = vunpack.c.l.b16 %v420
    %v841 = vunpack.c.l.b16 %v421
    %v842 = vunpack.c.l.b16 %v422
    %v843 = vunpack.c.l.b16 %v423
    %v844 = vunpack.c.l.b16 %v424
    %v845 = vunpack.c.l.b16 %v425
    %v846 = vunpack.c.l.b16 %v426
    %v847 = vunpack.c.l.b16 %v427
    %v848 = vunpack.c.l.b16 %v428
    %v849 = vunpack.c.l.b16 %v429
    %v850 = vunpack.c.l.b16 %v430
    %v851 = vunpack.c.l.b16 %v431
    %v852 = vunpack.c.l.b16 %v432
    %v853 = vunpack.c.l.b16 %v433
    %v854 = vunpack.c.l.b16 %v434
    %v855 = vunpack.c.l.b16 %v435
    %v856 = vunpack.c.l.b16 %v436
    %v857 = vunpack.c.l.b16 %v437
    %v858 = vunpack.c.l.b16 %v438
    %v859 = vunpack.c.l.b16 %v439
    %v860 = vunpack.c.l.b16 %v440
    %v861 = vunpack.c.l.b16 %v441
    %v862 = vunpack.c.l.b16 %v442
    %v863 = vunpack.c.l.b16 %v443
    %v864 = vunpack.c.l.b16 %v444
    %v865 = vunpack.c.l.b16 %v445
    %v866 = vunpack.c.l.b16 %v446
    %v867 = vunpack.c.l.b16 %v447
    %v868 = vunpack.c.l.b16 %v448
    %v869 = vunpack.c.l.b16 %v449
    %v870 = vunpack.c.l.b16 %v450
    %v871 = vunpack.c.l.b16 %v451
    %v872 = vunpack.c.l.b16 %v452
    %v873 = vunpack.c.l.b16 %v453
    %v874 = vunpack.c.l.b16 %v454
    %v875 = vunpack.c.l.b16 %v455
    %v876 = vunpack.c.l.b16 %v456
    %v877 = vunpack.c.l.b16 %v457
    %v878 = vunpack.c.l.b16 %v458
    %v879 = vunpack.c.l.b16 %v459
    %v880 = vunpack.c.l.b16 %v460
    %v881 = vunpack.c.l.b16 %v461
    %v882 = vunpack.c.l.b16 %v462
    %v883 = vunpack.c.l.b16 %v463
    %v884 = vunpack.c.l.b16 %v464
    %v885 = vunpack.c.l.b16 %v465
    %v886 = vunpack.c.l.b16 %v466
    %v887 = vunpack.c.l.b16 %v467
    %v888 = vunpack.c.l.b16 %v468
    %v889 = vunpack.c.l.b16 %v469
    %v890 = vunpack.c.l.b16 %v470
    %v891 = vunpack.c.l.b16 %v471
    %v892 = vunpack.c.l.b16 %v472
    %v893 = vunpack.c.l.b16 %v473
    %v894 = vunpack.c.l.b16 %v474
    %v895 = vunpack.c.l.b16 %v475
    %v896 = vunpack.c.l.b16 %v476
    %v897 = vunpack.c.l.b16 %v477
    %v898 = vunpack.c.l.b16 %v478
    %v899 = vunpack.c.l.b16 %v479
    %v900 = vunpack.c.l.b16 %v480
    %v901 = vunpack.c.l.b16 %v481
    %v902 = vunpack.c.l.b16 %v482
    %v903 = vunpack.c.l.b16 %v483
    %v904 = vunpack.c.l.b16 %v484
    %v905 = vunpack.c.l.b16 %v485
    %v906 = vunpack.c.l.b16 %v486
    %v907 = vunpack.c.l.b16 %v487
    %v908 = vunpack.c.l.b16 %v488
    %v909 = vunpack.c.l.b16 %v489
    %v910 = vunpack.c.l.b16 %v490
    %v911 = vunpack.c.l.b16 %v491
    %v912 = vunpack.c.l.b16 %v492
    %v913 = vunpack.c.l.b16 %v493
    %v914 = vunpack.c.l.b16 %v494
    %v915 = vunpack.c.l.b16 %v495
    %v916 = vunpack.c.l.b16 %v496
    %v917 = vunpack.c.l.b16 %v497
    %v918 = vunpack.c.l.b16 %v498
    %v919 = vunpack.c.l.b16 %v499
    %v920 = vunpack.c.l.b16 %v500
    %v921 = vunpack.c.l.b16 %v501
    %v922 = vunpack.c.l.b16 %v502
    %v923 = vunpack.c.l.b16 %v503
    %v924 = vunpack.c.l.b16 %v504
    %v925 = vunpack.c.l.b16 %v505
    %v926 = vunpack.c.l.b16 %v506
    %v927 = vunpack.c.l.b16 %v507
    %v928 = vunpack.c.l.b16 %v508
    %v929 = vunpack.c.l.b16 %v509
    %v930 = vunpack.c.l.b16 %v510
    %v931 = vunpack.c.l.b16 %v511
    %v932 = vunpack.c.l.b16 %v512
    %v933 = vunpack.c.l.b16 %v513
    %v934 = vunpack.c.l.b16 %v514
    %v935 = vunpack.c.l.b16 %v515
    %v936 = vunpack.c.l.b16 %v516
    %v937 = vunpack.c.l.b16 %v517
    %v938 = vunpack.c.l.b16 %v518
    %v939 = vunpack.c.l.b16 %v519
    %v940 = vunpack.c.l.b16 %v520
    %v941 = vunpack.c.l.b16 %v521
    %v942 = vunpack.c.l.b16 %v522
    %v943 = vunpack.c.l.b16 %v523
    %v944 = vunpack.c.l.b16 %v524
    %v945 = vunpack.c.l.b16 %v525
    %v946 = vunpack.c.l.b16 %v526
    %v947 = vunpack.c.l.b16 %v527
    %v948 = vunpack.c.l.b16 %v528
    %v949 = vunpack.c.l.b16 %v529
    %v950 = vunpack.c.l.b16 %v530
    %v951 = vunpack.c.l.b16 %v531
    %v952 = vunpack.c.l.b16 %v532
    %v953 = vunpack.c.l.b16 %v533
    %v954 = vunpack.c.l.b16 %v534
    %v955 = vunpack.c.l.b16 %v535
    %v956 = vunpack.c.l.b16 %v536
    %v957 = vunpack.c.l.b16 %v537
    %v958 = vunpack.c.l.b16 %v538
    %v959 = vunpack.c.l.b16 %v539
    %v960 = vunpack.c.l.b16 %v540
    %v961 = vpack.c.b16 %v754, %v753
    %v962 = vpack.c.b16 %v756, %v755
    %v963 = vpack.c.b16 %v758, %v757
    %v964 = vpack.c.b16 %v760, %v759
    %v965 = vpack.c.b16 %v762, %v761
    %v966 = vpack.c.b16 %v764, %v763
    %v967 = vpack.c.b16 %v766, %v765
    %v968 = vpack.c.b16 %v768, %v767
    %v969 = vpack.c.b16 %v770, %v769
    %v970 = vpack.c.b16 %v772, %v771
    %v971 = vpack.c.b16 %v774, %v773
    %v972 = vpack.c.b16 %v776, %v775
    %v973 = vpack.c.b16 %v778, %v777
    %v974 = vpack.c.b16 %v780, %v779
    %v975 = vpack.c.b16 %v782, %v781
    %v976 = vpack.c.b16 %v784, %v783
    %v977 = vpack.c.b16 %v786, %v785
    %v978 = vpack.c.b16 %v788, %v787
    %v979 = vpack.c.b16 %v790, %v789
    %v980 = vpack.c.b16 %v792, %v791
    %v981 = vpack.c.b16 %v794, %v793
    %v982 = vpack.c.b16 %v796, %v795
    %v983 = vpack.c.b16 %v798, %v797
    %v984 = vpack.c.b16 %v800, %v799
    %v985 = vpack.c.b16 %v802, %v801
    %v986 = vpack.c.b16 %v804, %v803
    %v987 = vpack.c.b16 %v806, %v805
    %v988 = vpack.c.b16 %v808, %v807
    %v989 = vpack.c.b16 %v810, %v809
    %v990 = vpack.c.b16 %v812, %v811
    %v991 = vpack.c.b16 %v814, %v813
    %v992 = vpack.c.b16 %v816, %v815
    %v993 = vpack.c.b16 %v818, %v817
    %v994 = vpack.c.b16 %v820, %v819
    %v995 = vpack.c.b16 %v822, %v821
    %v996 = vpack.c.b16 %v824, %v823
    %v997 = vpack.c.b16 %v826, %v825
    %v998 = vpack.c.b16 %v828, %v827
    %v999 = vpack.c.b16 %v830, %v829
    %v1000 = vpack.c.b16 %v832, %v831
    %v1001 = vpack.c.b16 %v834, %v833
    %v1002 = vpack.c.b16 %v836, %v835
    %v1003 = vpack.c.b16 %v838, %v837
    %v1004 = vpack.c.b16 %v840, %v839
    %v1005 = vpack.c.b16 %v842, %v841
    %v1006 = vpack.c.b16 %v844, %v843
    %v1007 = vpack.c.b16 %v846, %v845
    %v1008 = vpack.c.b16 %v848, %v847
    %v1009 = vpack.c.b16 %v850, %v849
    %v1010 = vpack.c.b16 %v852, %v851
    %v1011 = vpack.c.b16 %v854, %v853
    %v1012 = vpack.c.b16 %v856, %v855
    %v1013 = vpack.c.b16 %v858, %v857
    %v1014 = vpack.c.b16 %v860, %v859
    %v1015 = vpack.c.b16 %v862, %v861
    %v1016 = vpack.c.b16 %v864, %v863
    %v1017 = vpack.c.b16 %v866, %v865
    %v1018 = vpack.c.b16 %v868, %v867
    %v1019 = vpack.c.b16 %v870, %v869
    %v1020 = vpack.c.b16 %v872, %v871
    %v1021 = vpack.c.b16 %v874, %v873
    %v1022 = vpack.c.b16 %v876, %v875
    %v1023 = vpack.c.b16 %v878, %v877
    %v1024 = vpack.c.b16 %v880, %v879
    %v1025 = vpack.c.b16 %v882, %v881
    %v1026 = vpack.c.b16 %v884, %v883
    %v1027 = vpack.c.b16 %v886, %v885
    %v1028 = vpack.c.b16 %v888, %v887
    %v1029 = vpack.c.b16 %v890, %v889
    %v1030 = vpack.c.b16 %v892, %v891
    %v1031 = vpack.c.b16 %v894, %v893
    %v1032 = vpack.c.b16 %v896, %v895
    %v1033 = vpack.c.b16 %v898, %v897
    %v1034 = vpack.c.b16 %v900, %v899
    %v1035 = vpack.c.b16 %v902, %v901
    %v1036 = vpack.c.b16 %v904, %v903
    %v1037 = vpack.c.b16 %v906, %v905
    %v1038 = vpack.c.b16 %v908, %v907
    %v1039 = vpack.c.b16 %v910, %v909
    %v1040 = vpack.c.b16 %v912, %v911
    %v1041 = vpack.c.b16 %v914, %v913
    %v1042 = vpack.c.b16 %v916, %v915
    %v1043 = vpack.c.b16 %v918, %v917
    %v1044 = vpack.c.b16 %v920, %v919
    %v1045 = vpack.c.b16 %v922, %v921
    %v1046 = vpack.c.b16 %v924, %v923
    %v1047 = vpack.c.b16 %v926, %v925
    %v1048 = vpack.c.b16 %v928, %v927
    %v1049 = vpack.c.b16 %v930, %v929
    %v1050 = vpack.c.b16 %v932, %v931
    %v1051 = vpack.c.b16 %v934, %v933
    %v1052 = vpack.c.b16 %v936, %v935
    %v1053 = vpack.c.b16 %v938, %v937
    %v1054 = vpack.c.b16 %v940, %v939
    %v1055 = vpack.c.b16 %v942, %v941
    %v1056 = vpack.c.b16 %v944, %v943
    %v1057 = vpack.c.b16 %v946, %v945
    %v1058 = vpack.c.b16 %v948, %v947
    %v1059 = vpack.c.b16 %v950, %v949
    %v1060 = vpack.c.b16 %v952, %v951
    %v1061 = vpack.c.b16 %v954, %v953
    %v1062 = vpack.c.b16 %v956, %v955
    %v1063 = vpack.c.b16 %v958, %v957
    %v1064 = vpack.c.b16 %v960, %v959
    %1169 = vmatpush.bf16.msra.mxu0 %v968
    %1170 = vmatpush.bf16.msra.mxu0 %v967
    %1171 = vmatpush.bf16.msra.mxu0 %v966
    %1172 = vmatpush.bf16.msra.mxu0 %v965
    %1173 = vmatpush.bf16.msra.mxu0 %v964
    %1174 = vmatpush.bf16.msra.mxu0 %v963
    %1175 = vmatpush.bf16.msra.mxu0 %v962
    %1176 = vmatpush.bf16.msra.mxu0 %v961
    %1177 = vmatmul.bf16.gmra.mxu0 %v320
    %v1178 = vpop.f32.mrf.mxu0
    %v1179 = vadd.f32 %v543, %v1178
    %v1180 = vpop.f32.mrf.mxu0
    %1181 = vdwg.mxu0
    %1182 = vmatpush.bf16.msra.mxu0 %v976
    %1183 = vmatpush.bf16.msra.mxu0 %v975
    %1184 = vmatpush.bf16.msra.mxu0 %v974
    %1185 = vmatpush.bf16.msra.mxu0 %v973
    %1186 = vmatpush.bf16.msra.mxu0 %v972
    %1187 = vmatpush.bf16.msra.mxu0 %v971
    %1188 = vmatpush.bf16.msra.mxu0 %v970
    %1189 = vmatpush.bf16.msra.mxu0 %v969
    %1190 = vmatmul.bf16.gmra.mxu0 %v321
    %v1191 = vpop.f32.mrf.mxu0
    %v1192 = vadd.f32 %v1179, %v1191
    %v1193 = vpop.f32.mrf.mxu0
    %1194 = vdwg.mxu0
    %1195 = vmatpush.bf16.msra.mxu0 %v984
    %1196 = vmatpush.bf16.msra.mxu0 %v983
    %1197 = vmatpush.bf16.msra.mxu0 %v982
    %1198 = vmatpush.bf16.msra.mxu0 %v981
    %1199 = vmatpush.bf16.msra.mxu0 %v980
    %1200 = vmatpush.bf16.msra.mxu0 %v979
    %1201 = vmatpush.bf16.msra.mxu0 %v978
    %1202 = vmatpush.bf16.msra.mxu0 %v977
    %1203 = vmatmul.bf16.gmra.mxu0 %v322
    %v1204 = vpop.f32.mrf.mxu0
    %v1205 = vadd.f32 %v1192, %v1204
    %v1206 = vpop.f32.mrf.mxu0
    %1207 = vdwg.mxu0
    %1208 = vmatpush.bf16.msra.mxu0 %v992
    %1209 = vmatpush.bf16.msra.mxu0 %v991
    %1210 = vmatpush.bf16.msra.mxu0 %v990
    %1211 = vmatpush.bf16.msra.mxu0 %v989
    %1212 = vmatpush.bf16.msra.mxu0 %v988
    %1213 = vmatpush.bf16.msra.mxu0 %v987
    %1214 = vmatpush.bf16.msra.mxu0 %v986
    %1215 = vmatpush.bf16.msra.mxu0 %v985
    %1216 = vmatmul.bf16.gmra.mxu0 %v323
    %v1217 = vpop.f32.mrf.mxu0
    %v1218 = vadd.f32 %v1205, %v1217
    %v1219 = vpop.f32.mrf.mxu0
    %1220 = vdwg.mxu0
    %1221 = vmatpush.bf16.msra.mxu0 %v1000
    %1222 = vmatpush.bf16.msra.mxu0 %v999
    %1223 = vmatpush.bf16.msra.mxu0 %v998
    %1224 = vmatpush.bf16.msra.mxu0 %v997
    %1225 = vmatpush.bf16.msra.mxu0 %v996
    %1226 = vmatpush.bf16.msra.mxu0 %v995
    %1227 = vmatpush.bf16.msra.mxu0 %v994
    %1228 = vmatpush.bf16.msra.mxu0 %v993
    %1229 = vmatmul.bf16.gmra.mxu0 %v324
    %v1230 = vpop.f32.mrf.mxu0
    %v1231 = vadd.f32 %v1218, %v1230
    %v1232 = vpop.f32.mrf.mxu0
    %1233 = vdwg.mxu0
    %1234 = vmatpush.bf16.msra.mxu0 %v1008
    %1235 = vmatpush.bf16.msra.mxu0 %v1007
    %1236 = vmatpush.bf16.msra.mxu0 %v1006
    %1237 = vmatpush.bf16.msra.mxu0 %v1005
    %1238 = vmatpush.bf16.msra.mxu0 %v1004
    %1239 = vmatpush.bf16.msra.mxu0 %v1003
    %1240 = vmatpush.bf16.msra.mxu0 %v1002
    %1241 = vmatpush.bf16.msra.mxu0 %v1001
    %1242 = vmatmul.bf16.gmra.mxu0 %v325
    %v1243 = vpop.f32.mrf.mxu0
    %v1244 = vadd.f32 %v1231, %v1243
    %v1245 = vpop.f32.mrf.mxu0
    %1246 = vdwg.mxu0
    %1247 = vmatpush.bf16.msra.mxu0 %v1016
    %1248 = vmatpush.bf16.msra.mxu0 %v1015
    %1249 = vmatpush.bf16.msra.mxu0 %v1014
    %1250 = vmatpush.bf16.msra.mxu0 %v1013
    %1251 = vmatpush.bf16.msra.mxu0 %v1012
    %1252 = vmatpush.bf16.msra.mxu0 %v1011
    %1253 = vmatpush.bf16.msra.mxu0 %v1010
    %1254 = vmatpush.bf16.msra.mxu0 %v1009
    %1255 = vmatmul.bf16.gmra.mxu0 %v326
    %v1256 = vpop.f32.mrf.mxu0
    %v1257 = vadd.f32 %v1244, %v1256
    %v1258 = vpop.f32.mrf.mxu0
    %1259 = vdwg.mxu0
    %1260 = vmatpush.bf16.msra.mxu0 %v1024
    %1261 = vmatpush.bf16.msra.mxu0 %v1023
    %1262 = vmatpush.bf16.msra.mxu0 %v1022
    %1263 = vmatpush.bf16.msra.mxu0 %v1021
    %1264 = vmatpush.bf16.msra.mxu0 %v1020
    %1265 = vmatpush.bf16.msra.mxu0 %v1019
    %1266 = vmatpush.bf16.msra.mxu0 %v1018
    %1267 = vmatpush.bf16.msra.mxu0 %v1017
    %1268 = vmatmul.bf16.gmra.mxu0 %v327
    %v1269 = vpop.f32.mrf.mxu0
    %v1270 = vadd.f32 %v1257, %v1269
    %v1271 = vpop.f32.mrf.mxu0
    %1272 = vdwg.mxu0
    %1273 = vmatpush.bf16.msra.mxu0 %v1032
    %1274 = vmatpush.bf16.msra.mxu0 %v1031
    %1275 = vmatpush.bf16.msra.mxu0 %v1030
    %1276 = vmatpush.bf16.msra.mxu0 %v1029
    %1277 = vmatpush.bf16.msra.mxu0 %v1028
    %1278 = vmatpush.bf16.msra.mxu0 %v1027
    %1279 = vmatpush.bf16.msra.mxu0 %v1026
    %1280 = vmatpush.bf16.msra.mxu0 %v1025
    %1281 = vmatmul.bf16.gmra.mxu0 %v328
    %v1282 = vpop.f32.mrf.mxu0
    %v1283 = vadd.f32 %v1270, %v1282
    %v1284 = vpop.f32.mrf.mxu0
    %1285 = vdwg.mxu0
    %1286 = vmatpush.bf16.msra.mxu0 %v1040
    %1287 = vmatpush.bf16.msra.mxu0 %v1039
    %1288 = vmatpush.bf16.msra.mxu0 %v1038
    %1289 = vmatpush.bf16.msra.mxu0 %v1037
    %1290 = vmatpush.bf16.msra.mxu0 %v1036
    %1291 = vmatpush.bf16.msra.mxu0 %v1035
    %1292 = vmatpush.bf16.msra.mxu0 %v1034
    %1293 = vmatpush.bf16.msra.mxu0 %v1033
    %1294 = vmatmul.bf16.gmra.mxu0 %v329
    %v1295 = vpop.f32.mrf.mxu0
    %v1296 = vadd.f32 %v1283, %v1295
    %v1297 = vpop.f32.mrf.mxu0
    %1298 = vdwg.mxu0
    %1299 = vmatpush.bf16.msra.mxu0 %v1048
    %1300 = vmatpush.bf16.msra.mxu0 %v1047
    %1301 = vmatpush.bf16.msra.mxu0 %v1046
    %1302 = vmatpush.bf16.msra.mxu0 %v1045
    %1303 = vmatpush.bf16.msra.mxu0 %v1044
    %1304 = vmatpush.bf16.msra.mxu0 %v1043
    %1305 = vmatpush.bf16.msra.mxu0 %v1042
    %1306 = vmatpush.bf16.msra.mxu0 %v1041
    %1307 = vmatmul.bf16.gmra.mxu0 %v330
    %v1308 = vpop.f32.mrf.mxu0
    %v1309 = vadd.f32 %v1296, %v1308
    %v1310 = vpop.f32.mrf.mxu0
    %1311 = vdwg.mxu0
    %1312 = vmatpush.bf16.msra.mxu0 %v1056
    %1313 = vmatpush.bf16.msra.mxu0 %v1055
    %1314 = vmatpush.bf16.msra.mxu0 %v1054
    %1315 = vmatpush.bf16.msra.mxu0 %v1053
    %1316 = vmatpush.bf16.msra.mxu0 %v1052
    %1317 = vmatpush.bf16.msra.mxu0 %v1051
    %1318 = vmatpush.bf16.msra.mxu0 %v1050
    %1319 = vmatpush.bf16.msra.mxu0 %v1049
    %1320 = vmatmul.bf16.gmra.mxu0 %v331
    %v1321 = vpop.f32.mrf.mxu0
    %v1322 = vadd.f32 %v1309, %v1321
    %v1323 = vpop.f32.mrf.mxu0
    %1324 = vdwg.mxu0
    %1325 = vmatpush.bf16.msra.mxu0 %v1064
    %1326 = vmatpush.bf16.msra.mxu0 %v1063
    %1327 = vmatpush.bf16.msra.mxu0 %v1062
    %1328 = vmatpush.bf16.msra.mxu0 %v1061
    %1329 = vmatpush.bf16.msra.mxu0 %v1060
    %1330 = vmatpush.bf16.msra.mxu0 %v1059
    %1331 = vmatpush.bf16.msra.mxu0 %v1058
    %1332 = vmatpush.bf16.msra.mxu0 %v1057
    %1333 = vmatmul.bf16.gmra.mxu0 %v332
    %v1334 = vpop.f32.mrf.mxu0
    %v1335 = vadd.f32 %v1322, %v1334
    %v1336 = vpop.f32.mrf.mxu0
    %1337 = vdwg.mxu0
    %vm1338 = vcmask 326656
    %1339 = vst.msk [vmem:[#allocation2] sm:$0xff] %vm1338, %v1335
    // Predicated region
    $region22: #{multiclass_forward.1} parent=1 // pred_check
      _
    $region23: #{multiclass_forward.1} parent=1 // pred_check_branch
      %1341 = sbr.rel (0) target = $region25
    $region24: #{multiclass_forward.1} parent=1 // pred_region
      %1343 = vsyncadd [#allocation3], 0
      %s1345 = sshll.u32 [#allocation2], 4
      %s1346 = int_to_ptr.vmem [resolvable:$true] %s1345
      %s1347 = sshll.u32 %s5, 4
      %s1348 = int_to_ptr.hbm [resolvable:$true] %s1347
      %1350 = dma.vmem_to_hbm [thread:$0]  %s1346, 128, %s1348, [#allocation3]
    $region25: #{multiclass_forward.1} parent=1 // pred_fallthru
      _
    // Predicated region
    $region26: #{multiclass_forward.1} parent=1 // pred_check
      _
    $region27: #{multiclass_forward.1} parent=1 // pred_check_branch
      %1352 = sbr.rel (0) target = $region29
    $region28: #{multiclass_forward.1} parent=1 // pred_region
      %1354 = dma.done [#allocation3], 128
    $region29: #{multiclass_forward.1} parent=1 // pred_fallthru
      _
    %1355 = vsyncpa [#allocation3], 1

</llo_original>
